<compile_context>
chip_gen: v5e
topology: v5e:2x2
jax: 0.10.0
libtpu: 0.0.40
codegen_flags: <defaults>
</compile_context>

<pallas_src>
import jax
import jax.numpy as jnp
from jax.experimental import pallas as pl
from jax.experimental.pallas import tpu as pltpu


_LANES = 128
_NEG_BIG = -1e30  # finite "minus infinity" bias for padded (non-existent) classes


def _round_up(x, m):
    return ((x + m - 1) // m) * m


# --------------------------------------------------------------------------
# Fused head kernel:  pooled patches -> (fused encoder+classifier) linear -> softmax
# --------------------------------------------------------------------------
def _classformer_head_kernel(xp_ref, w_ref, b_ref, o_ref):
    # xp_ref: (TB, Dp)   bf16   pooled patch features (mean over patch sequence)
    # w_ref : (Dp, NCp)  bf16   fused encoder@classifier weight, padded to 128 lanes
    # b_ref : (1,  NCp)  f32    fused bias, padded lanes = -1e30
    # o_ref : (TB, NCp)  f32    softmax probabilities (padded lanes == 0)
    logits = jnp.dot(xp_ref[...], w_ref[...],
                     preferred_element_type=jnp.float32) + b_ref[...]   # (TB, NCp) f32

    # Softmax over the class dim; padded lanes have exp() == 0 so they drop out.
    m = jnp.max(logits, axis=-1, keepdims=True)
    e = jnp.exp(logits - m)
    denom = jnp.sum(e, axis=-1, keepdims=True)
    o_ref[...] = (e / denom).astype(o_ref.dtype)          # exact normalization


def _classformer_head_call(xp_bf16, w_pad_bf16, b_pad_f32, tb):
    Bp, DP = xp_bf16.shape
    NCP = w_pad_bf16.shape[1]
    grid = (Bp // tb,)
    return pl.pallas_call(
        _classformer_head_kernel,
        out_shape=jax.ShapeDtypeStruct((Bp, NCP), jnp.float32),
        grid_spec=pl.GridSpec(
            grid=grid,
            in_specs=[
                pl.BlockSpec((tb, DP), lambda i: (i, 0)),    # batch-tiled activations
                pl.BlockSpec((DP, NCP), lambda i: (0, 0)),   # weights stay VMEM-resident
                pl.BlockSpec((1, NCP), lambda i: (0, 0)),
            ],
            out_specs=pl.BlockSpec((tb, NCP), lambda i: (i, 0)),
        ),
        compiler_params=pltpu.CompilerParams(
            dimension_semantics=("parallel",),               # shards batch across TCs on v7x
            vmem_limit_bytes=32 * 1024 * 1024,               # safe for v7x's 64 MiB VMEM
        ),
    )(xp_bf16, w_pad_bf16, b_pad_f32)


# --------------------------------------------------------------------------
# Patch mean-pooling directly from the NCHW image (no 6-D transpose copy).
# pooled[b, c*P*P + pi*P + pj] = mean_{hp,wp} img[b, c, hp*P+pi, wp*P+pj]
# which equals the sequence-mean of the flattened (C, P, P) patch features.
# --------------------------------------------------------------------------
def pooled_patch_features(img, patch_size):
    B, Cc, H, W = img.shape
    P = patch_size
    x = img.reshape(B, Cc, H // P, P, W // P, P)
    x = jnp.mean(x, axis=(2, 4))                             # (B, Cc, P, P)
    return x.reshape(B, Cc * P * P)                          # (B, Dp)


# --------------------------------------------------------------------------
# One-time parameter preprocessing: fuse the two linears, pad, cast to bf16.
# --------------------------------------------------------------------------
def prepare_classformer_params(params):
    enc_w = params["enc_w"].astype(jnp.float32)              # (Dp, C)
    enc_b = params["enc_b"].astype(jnp.float32)              # (1, C)
    cls_w = params["cls_w"].astype(jnp.float32)              # (C, NC)
    cls_b = params["cls_b"].astype(jnp.float32)              # (1, NC)

    NC = cls_w.shape[1]
    NCP = _round_up(max(NC, 1), _LANES)                      # lane-dense output slab

    # mean(x) @ enc_w + enc_b, then @ cls_w + cls_b  ==  mean(x) @ W_fused + b_fused
    w_fused = enc_w @ cls_w                                  # (Dp, NC) f32
    b_fused = enc_b @ cls_w + cls_b                          # (1, NC)  f32

    w_pad = jnp.zeros((w_fused.shape[0], NCP), jnp.bfloat16)
    w_pad = w_pad.at[:, :NC].set(w_fused.astype(jnp.bfloat16))
    b_pad = jnp.full((1, NCP), _NEG_BIG, jnp.float32)
    b_pad = b_pad.at[:, :NC].set(b_fused)
    return {"w_fused": w_pad, "b_fused": b_pad, "n_classes": NC}


# --------------------------------------------------------------------------
# Full Classformer forward
# --------------------------------------------------------------------------
def classformer_forward(img, prepped, patch_size, max_batch_tile=256):
    B = img.shape[0]
    NC = prepped["n_classes"]

    # Pooled patch features (exact: mean over the sequence commutes with the
    # linear encoder); pre-cast to bf16 in the wrapper (halves activation DMA,
    # no in-kernel casts on v5e's VPU).
    xp = pooled_patch_features(img, patch_size).astype(jnp.bfloat16)   # (B, Dp)

    # Batch tiling: TB a multiple of 8 (sublane-dense stores), capped for VMEM.
    TB = min(max_batch_tile, _round_up(B, 8))
    Bp = _round_up(B, TB)
    if Bp != B:
        xp = jnp.pad(xp, ((0, Bp - B), (0, 0)))

    probs_pad = _classformer_head_call(xp, prepped["w_fused"],
                                       prepped["b_fused"], TB)         # (Bp, NCp)
    return probs_pad[:B, :NC].reshape(B, 1, NC)              # match PyTorch (B, 1, NC)


# --------------------------------------------------------------------------
# Pure-JAX reference in the ORIGINAL op order (patchify -> encoder over all
# tokens -> pool -> classifier -> softmax), full f32, to validate the rewrite.
# --------------------------------------------------------------------------
def _reference_forward(img, params, patch_size):
    B, Cc, H, W = img.shape
    P = patch_size
    x = img.reshape(B, Cc, H // P, P, W // P, P)
    x = jnp.transpose(x, (0, 2, 4, 1, 3, 5)).reshape(
        B, (H // P) * (W // P), Cc * P * P)                          # (B, S, Dp)
    x_en = jnp.einsum("bsd,dc->bsc", x, params["enc_w"]) + params["enc_b"]
    pooled = jnp.mean(x_en, axis=1, keepdims=True)                   # (B, 1, C)
    logits = jnp.einsum("bsc,cn->bsn", pooled, params["cls_w"]) + params["cls_b"]
    return jax.nn.softmax(logits, axis=2)


if __name__ == "__main__":
    key = jax.random.PRNGKey(0)
    k_img, k_ew, k_eb, k_cw, k_cb = jax.random.split(key, 5)

    # small shapes: batch=2, 3-channel 16x16 image, patch_size=4
    B, H, W = 2, 16, 16
    PATCH = 4
    D_PATCH = PATCH * PATCH * 3          # 48 = embedding.patch_size**2 * 3
    C_OUT = 64                           # encoder_decoder.c_out (stand-in for 2048)
    N_CLASSES = 2

    img = jax.random.normal(k_img, (B, 3, H, W), dtype=jnp.float32)

    params = {
        "enc_w": jax.random.normal(k_ew, (D_PATCH, C_OUT), dtype=jnp.float32) * 0.05,
        "enc_b": jax.random.normal(k_eb, (1, C_OUT), dtype=jnp.float32) * 0.01,
        "cls_w": jax.random.normal(k_cw, (C_OUT, N_CLASSES), dtype=jnp.float32) * 0.05,
        "cls_b": jax.random.normal(k_cb, (1, N_CLASSES), dtype=jnp.float32) * 0.01,
    }

    # One-time weight fusion / padding (kept out of the per-call forward path).
    prepped = prepare_classformer_params(params)

    pred = classformer_forward(img, prepped, PATCH)
    pred = jax.block_until_ready(pred)

    ref = _reference_forward(img, params, PATCH)
    assert pred.shape == (B, 1, N_CLASSES), pred.shape
    # bf16 MXU inputs -> slightly looser tolerance vs. the pure-f32 reference.
    assert jnp.allclose(pred, ref, atol=1e-2, rtol=1e-2), (pred, ref)
    # exact divide in the kernel -> rows sum to 1 to f32 rounding.
    assert jnp.allclose(jnp.sum(pred, axis=2), 1.0, atol=1e-4)

    print("KERNEL_OK")
</pallas_src>

<mosaic_0001>
module attributes {stable_mosaic.version = 11 : i64} {
  func.func @_classformer_head_kernel(%arg0: i32, %arg1: memref<8x48xbf16, #tpu.memory_space<vmem>>, %arg2: memref<48x128xbf16, #tpu.memory_space<vmem>>, %arg3: memref<1x128xf32, #tpu.memory_space<vmem>>, %arg4: memref<8x128xf32, #tpu.memory_space<vmem>>) attributes {dimension_semantics = [#tpu.dimension_semantics<parallel>], iteration_bounds = array<i64: 1>, scalar_prefetch = 0 : i64, scratch_operands = 0 : i64, tpu.core_type = #tpu.core_type<tc>, window_params = [{transform_indices = @transform_0, window_bounds = array<i64: 8, 48>}, {pipeline_mode = #tpu.pipeline_mode<synchronous>, transform_indices = @transform_1, window_bounds = array<i64: 48, 128>}, {pipeline_mode = #tpu.pipeline_mode<synchronous>, transform_indices = @transform_2, window_bounds = array<i64: 1, 128>}, {transform_indices = @transform_3, window_bounds = array<i64: 8, 128>}]} {
    %c0 = arith.constant 0 : index
    %c0_0 = arith.constant 0 : index
    %0 = vector.load %arg1[%c0, %c0_0] : memref<8x48xbf16, #tpu.memory_space<vmem>>, vector<8x48xbf16>
    %c0_1 = arith.constant 0 : index
    %c0_2 = arith.constant 0 : index
    %1 = vector.load %arg2[%c0_1, %c0_2] : memref<48x128xbf16, #tpu.memory_space<vmem>>, vector<48x128xbf16>
    %cst = arith.constant dense<0.000000e+00> : vector<8x128xf32>
    %2 = tpu.matmul %0, %1, %cst {dimension_numbers = #tpu.dot_dimension_numbers<[1], [0], [0], [1], [0, 0, 1, 1], [], []>} : vector<8x48xbf16>, vector<48x128xbf16>, vector<8x128xf32> -> vector<8x128xf32>
    %c0_3 = arith.constant 0 : index
    %c0_4 = arith.constant 0 : index
    %3 = vector.load %arg3[%c0_3, %c0_4] : memref<1x128xf32, #tpu.memory_space<vmem>>, vector<1x128xf32>
    %4 = vector.broadcast %3 : vector<1x128xf32> to vector<8x128xf32>
    %5 = arith.addf %2, %4 : vector<8x128xf32>
    %cst_5 = arith.constant dense<0xFF800000> : vector<8xf32>
    %6 = vector.multi_reduction <maximumf>, %5, %cst_5 [1] : vector<8x128xf32> to vector<8xf32>
    %7 = vector.shape_cast %6 : vector<8xf32> to vector<8x1xf32>
    %8 = vector.broadcast %7 : vector<8x1xf32> to vector<8x128xf32>
    %9 = arith.subf %5, %8 : vector<8x128xf32>
    %10 = math.exp %9 : vector<8x128xf32>
    %cst_6 = arith.constant dense<0.000000e+00> : vector<8xf32>
    %11 = vector.multi_reduction <add>, %10, %cst_6 [1] : vector<8x128xf32> to vector<8xf32>
    %12 = vector.shape_cast %11 : vector<8xf32> to vector<8x1xf32>
    %13 = vector.broadcast %12 : vector<8x1xf32> to vector<8x128xf32>
    %14 = arith.divf %10, %13 : vector<8x128xf32>
    %c0_7 = arith.constant 0 : index
    %c0_8 = arith.constant 0 : index
    %15 = vector.load %arg4[%c0_7, %c0_8] : memref<8x128xf32, #tpu.memory_space<vmem>>, vector<8x128xf32>
    tpu.vector_store %arg4[%c0_7, %c0_8], %14 {strides = array<i32>} : memref<8x128xf32, #tpu.memory_space<vmem>>, vector<8x128xf32>,
    return
  }
  func.func @transform_0(%arg0: i32) -> (i32, i32) {
    %c0_i32 = arith.constant 0 : i32
    %c0_i32_0 = arith.constant 0 : i32
    return %arg0, %c0_i32 : i32, i32
  }
  func.func @transform_1(%arg0: i32) -> (i32, i32) {
    %c0_i32 = arith.constant 0 : i32
    %c0_i32_0 = arith.constant 0 : i32
    %c0_i32_1 = arith.constant 0 : i32
    return %c0_i32, %c0_i32_0 : i32, i32
  }
  func.func @transform_2(%arg0: i32) -> (i32, i32) {
    %c0_i32 = arith.constant 0 : i32
    %c0_i32_0 = arith.constant 0 : i32
    %c0_i32_1 = arith.constant 0 : i32
    return %c0_i32, %c0_i32_0 : i32, i32
  }
  func.func @transform_3(%arg0: i32) -> (i32, i32) {
    %c0_i32 = arith.constant 0 : i32
    %c0_i32_0 = arith.constant 0 : i32
    return %arg0, %c0_i32 : i32, i32
  }
}

</mosaic_0001>

<llo_original>
// kernel: tpu_custom_call.1
$region0: #{tpu_custom_call.1}
  #allocation0 [shape = 'u32[]', space=smem, size = 0x4, offset = 0x4, fixed_abs, tag = 'smem constant byte address 0x4 - core index']
  #allocation1 [shape = 'u32[72,128]{1,0:T(1,128)}', space=vmem, size = 0x9000, scoped, tag = 'internal scratch']
  %s0 = inlined_call_operand.hbm [shape: bf16[8,48], index: 0, kind: input, shape index: {}]
  %s1 = inlined_call_operand.hbm [shape: bf16[48,128], index: 1, kind: input, shape index: {}]
  %s2 = inlined_call_operand.vmem [shape: f32[1,128], index: 2, kind: input, shape index: {}]
  %s3 = inlined_call_operand.hbm [shape: f32[8,128], index: 3, kind: output, shape index: {}]
  %s4 = sld [smem:[#allocation0]]
  $region30: #{tpu_custom_call.1} parent=0
    _
  %s6 = ssub.s32 1, %s4
  %s7 = scalar_select 0, %s6, %s4
  $region1: #{tpu_custom_call.1} parent=0
    #allocation2 [shape = 'u8[2048]{0}', space=vmem, size = 0x800, scoped, tag = 'input window, operand 0, single buffered']
    #allocation3 [shape = 's32[1]{0}', space=sflag, size = 0x4, scoped, tag = 'scoped memory for tpu_custom_call.1']
    #allocation4 [shape = 's32[1]{0}', space=sflag, size = 0x4, scoped, tag = 'scoped memory for tpu_custom_call.1']
    #allocation5 [shape = 'u8[12288]{0}', space=vmem, size = 0x3000, scoped, tag = 'input window, operand 1, single buffered']
    #allocation6 [shape = 's32[1]{0}', space=sflag, size = 0x4, scoped, tag = 'scoped memory for tpu_custom_call.1']
    #allocation7 [shape = 'u8[4096]{0}', space=vmem, size = 0x1000, scoped, tag = 'output window, operand 0, single buffered']
    %8 = vsyncpa [#allocation3], 0
    %9 = vsyncpa [#allocation6], 0
    %10 = vsyncpa [#allocation4], 0
    // Predicated region
    $region2: #{tpu_custom_call.1} parent=1 // pred_check
      _
    $region3: #{tpu_custom_call.1} parent=1 // pred_check_branch
      %12 = sbr.rel (0) target = $region5
    $region4: #{tpu_custom_call.1} parent=1 // pred_region
      %14 = vsyncadd [#allocation3], 0
      %s16 = sshll.u32 %s0, 4
      %s17 = int_to_ptr.hbm [resolvable:$true] %s16
      %s18 = sshll.u32 [#allocation2], 4
      %s19 = int_to_ptr.vmem [resolvable:$true] %s18
      %21 = dma.hbm_to_vmem [thread:$0]  %s17, 64, %s19, [#allocation3]
    $region5: #{tpu_custom_call.1} parent=1 // pred_fallthru
      _
    // Predicated region
    $region6: #{tpu_custom_call.1} parent=1 // pred_check
      _
    $region7: #{tpu_custom_call.1} parent=1 // pred_check_branch
      %23 = sbr.rel (0) target = $region9
    $region8: #{tpu_custom_call.1} parent=1 // pred_region
      %25 = vsyncadd [#allocation6], 0
      %s26 = sshll.u32 %s1, 4
      %s27 = int_to_ptr.hbm [resolvable:$true] %s26
      %s28 = sshll.u32 [#allocation5], 4
      %s29 = int_to_ptr.vmem [resolvable:$true] %s28
      %34 = dma.hbm_to_vmem [thread:$0]  %s27, 384, %s29, [#allocation6], 64, 64, 4
    $region9: #{tpu_custom_call.1} parent=1 // pred_fallthru
      _
    // Predicated region
    $region10: #{tpu_custom_call.1} parent=1 // pred_check
      _
    $region11: #{tpu_custom_call.1} parent=1 // pred_check_branch
      %36 = sbr.rel (0) target = $region13
    $region12: #{tpu_custom_call.1} parent=1 // pred_region
      _
    $region13: #{tpu_custom_call.1} parent=1 // pred_fallthru
      _
    // Predicated region
    $region14: #{tpu_custom_call.1} parent=1 // pred_check
      _
    $region15: #{tpu_custom_call.1} parent=1 // pred_check_branch
      %38 = sbr.rel (0) target = $region17
    $region16: #{tpu_custom_call.1} parent=1 // pred_region
      %40 = dma.done [#allocation3], 64
    $region17: #{tpu_custom_call.1} parent=1 // pred_fallthru
      _
    // Predicated region
    $region18: #{tpu_custom_call.1} parent=1 // pred_check
      _
    $region19: #{tpu_custom_call.1} parent=1 // pred_check_branch
      %42 = sbr.rel (0) target = $region21
    $region20: #{tpu_custom_call.1} parent=1 // pred_region
      %44 = dma.done [#allocation6], 384
    $region21: #{tpu_custom_call.1} parent=1 // pred_fallthru
      _
    %v46 = vld [vmem:[#allocation2] sm:$0xf]
    %v47 = vld [vmem:[#allocation5] sm:$0xf]
    %v48 = vld [vmem:[#allocation5 + $0x4] sm:$0xf]
    %v49 = vld [vmem:[#allocation5 + $0x8] sm:$0xf]
    %v50 = vld [vmem:[#allocation5 + $0xc] sm:$0xf]
    %v51 = vld [vmem:[#allocation5 + $0x10] sm:$0xf]
    %v52 = vld [vmem:[#allocation5 + $0x14] sm:$0xf]
    %v53 = vld [vmem:[%s2] sm:$0x1]
    %v55 = vperm.slane %v53, 0
    %v63 = vunpack.c.l.b16 %v47
    %v64 = vunpack.c.l.b16 %v48
    %v65 = vunpack.c.l.b16 %v49
    %v66 = vunpack.c.l.b16 %v50
    %v67 = vunpack.c.l.b16 %v51
    %v68 = vunpack.c.l.b16 %v52
    %v69 = vpack.c.b16 %v64, %v63
    %v70 = vpack.c.b16 %v66, %v65
    %v71 = vpack.c.b16 %v68, %v67
    %vm75 = vcmask 392192
    %v77 = vsel %vm75, %v46, 0
    %79 = vmatpush.bf16.msra.mxu0 0
    %80 = vmatpush.bf16.msra.mxu0 0
    %81 = vmatpush.bf16.msra.mxu0 0
    %82 = vmatpush.bf16.msra.mxu0 0
    %83 = vmatpush.bf16.msra.mxu0 0
    %84 = vmatpush.bf16.msra.mxu0 %v71
    %85 = vmatpush.bf16.msra.mxu0 %v70
    %86 = vmatpush.bf16.msra.mxu0 %v69
    %87 = vmatmul.bf16.gmra.mxu0 %v77
    %v88 = vpop.f32.mrf.mxu0
    %v89 = vadd.f32 %v55, %v88
    %v90 = vpop.f32.mrf.mxu0
    %91 = vdwg.mxu0
    %92 = vmax.xlane.f32.xlu0 %v89
    %v93 = vpop.xlane.xlu0 %92
    %v94 = vsub.f32 %v89, %v93
    %v95 = vmul.f32 %v94, 1.442695
    %v96 = vpow.pop %v95
    %97 = vadd.xlane.f32.xlu0 %v96
    %v98 = vpop.xlane.xlu0 %97
    %v99 = vrcp.pop %v98
    %v100 = vmul.f32 %v98, %v99
    %v101 = vsub.f32 1.0, %v100
    %v102 = vmul.f32 %v99, %v101
    %v103 = vadd.f32 %v99, %v102
    %vm104 = vweird.f32 %v98
    %vm105 = vweird.f32 %v99
    %vm106 = vmor %vm104, %vm105
    %v107 = vsel %vm106, %v99, %v103
    %v108 = vand.u32 2147483647, %v98
    %vm109 = vcmp.eq.f32.partialorder %v108, 8.507059e+37
    %v110 = vand.u32 %v98, 2147483648
    %v111 = vor.u32 1.1754944e-38, %v110
    %v112 = vsel %vm109, %v111, %v107
    %v113 = vmul.f32 %v96, %v112
    %114 = vst [vmem:[#allocation7] sm:$0xff] %v113
    // Predicated region
    $region22: #{tpu_custom_call.1} parent=1 // pred_check
      _
    $region23: #{tpu_custom_call.1} parent=1 // pred_check_branch
      %116 = sbr.rel (0) target = $region25
    $region24: #{tpu_custom_call.1} parent=1 // pred_region
      %118 = vsyncadd [#allocation4], 0
      %s120 = sshll.u32 [#allocation7], 4
      %s121 = int_to_ptr.vmem [resolvable:$true] %s120
      %s122 = sshll.u32 %s3, 4
      %s123 = int_to_ptr.hbm [resolvable:$true] %s122
      %125 = dma.vmem_to_hbm [thread:$0]  %s121, 128, %s123, [#allocation4]
    $region25: #{tpu_custom_call.1} parent=1 // pred_fallthru
      _
    // Predicated region
    $region26: #{tpu_custom_call.1} parent=1 // pred_check
      _
    $region27: #{tpu_custom_call.1} parent=1 // pred_check_branch
      %127 = sbr.rel (0) target = $region29
    $region28: #{tpu_custom_call.1} parent=1 // pred_region
      %129 = dma.done [#allocation4], 128
    $region29: #{tpu_custom_call.1} parent=1 // pred_fallthru
      _
    %130 = vsyncpa [#allocation3], 1
    %131 = vsyncpa [#allocation6], 1
    %132 = vsyncpa [#allocation4], 1

</llo_original>
